<compile_context>
chip_gen: v7x
topology: tpu7x:2x2x1
jax: 0.10.0
libtpu: 0.0.40
codegen_flags: <defaults>
</compile_context>

<pallas_src>
import jax
import jax.numpy as jnp
from jax.experimental import pallas as pl
from jax.experimental.pallas import tpu as pltpu


def _round_up(x, m):
    return ((x + m - 1) // m) * m


def _usable_vmem_bytes():
    """~80% of per-core VMEM (v5e/v6e: 128 MiB, v7x: 64 MiB per TensorCore)."""
    try:
        cap = int(pltpu.get_tpu_info().vmem_capacity_bytes)
    except Exception:
        cap = 64 * 1024 * 1024  # conservative (v7x-sized) default if query unavailable
    return int(cap * 0.8)


# ---------------------------------------------------------------------------
# Path A kernel: VMEM-resident table + one-hot MXU matmul.
# ---------------------------------------------------------------------------
def _embed_onehot_kernel(ids_ref, table_ref, out_ref):
    # ids_ref:   (T, 1) int32 token ids for this tile (tiny DMA, double-buffered).
    # table_ref: (V, D) full embedding table, VMEM-resident (constant index_map).
    # out_ref:   (T, D) lane-dense output tile -> unmasked vst writeback.
    T = ids_ref.shape[0]
    V = table_ref.shape[0]

    ids = ids_ref[...]                                        # (T, 1)
    vocab = jax.lax.broadcasted_iota(jnp.int32, (T, V), 1)    # (T, V) column ids
    # One-hot in the table dtype: exactly one 1.0 per row -> bit-exact lookup.
    # bf16 tables therefore use the native bf16 MXU path on v6e/v7x for free.
    onehot = (ids == vocab).astype(table_ref.dtype)           # (T, V)

    out_ref[...] = jnp.dot(
        onehot, table_ref[...], preferred_element_type=jnp.float32
    ).astype(out_ref.dtype)


# ---------------------------------------------------------------------------
# Path B kernel: scalar-prefetch row gather (large vocab fallback).
# ---------------------------------------------------------------------------
def _embed_row_gather_kernel(ids_ref, row_ref, out_ref):
    del ids_ref  # consumed only by the index_maps (scalar prefetch)
    out_ref[...] = row_ref[...].reshape(out_ref.shape)


def embedder_forward(ids, emb_table, *, max_tile_tokens=4096):
    """Embedding lookup: ids [B, S] int -> [B, S, D] (== nn.Embedding(ids))."""
    B, S = ids.shape
    V, D = emb_table.shape
    n = B * S
    itemsize = jnp.dtype(emb_table.dtype).itemsize

    # PyTorch raises on out-of-range ids; we clamp instead so a bad id can never
    # drive an out-of-bounds (data-dependent) access on-chip.
    ids_flat = jnp.clip(ids.reshape(-1).astype(jnp.int32), 0, V - 1)

    usable_vmem = _usable_vmem_bytes()
    table_bytes = V * D * itemsize

    def onehot_vmem_needed(T):
        return (
            2 * table_bytes            # table (counted double-buffered as a safe bound,
                                       #        even though we request Buffered(1))
            + 2 * T * 4                # ids tiles, double-buffered int32
            + 2 * T * D * itemsize     # output tiles, double-buffered
            + T * V * itemsize         # (T, V) one-hot temporary
            + T * D * 4                # (T, D) f32 accumulator
            + (2 << 20)                # slack for misc temporaries
        )

    # Generation-aware strategy choice: keep the table resident + one-hot MXU only
    # while it (and the per-tile temporaries) stay comfortably inside the budget and
    # the vocab is small enough that O(T*V*D) one-hot flops stay cheap.
    use_onehot = (
        table_bytes <= usable_vmem // 2
        and V <= 8192
        and onehot_vmem_needed(8) <= usable_vmem
    )

    if use_onehot:
        # Biggest sublane-dense token tile that fits; prefer a T that divides n so no
        # padded rows are written (avoids a whole post-kernel slice over the output).
        n8 = max(_round_up(n, 8), 8)
        candidates = [
            t for t in (4096, 2048, 1024, 512, 256, 128, 64, 32, 16, 8)
            if t <= min(max_tile_tokens, n8) and onehot_vmem_needed(t) <= usable_vmem
        ]
        if not candidates:
            candidates = [8]
        divisors = [t for t in candidates if n % t == 0]
        T = divisors[0] if divisors else candidates[0]
        n_pad = _round_up(n, T)

        ids_tiled = ids_flat
        if n_pad != n:
            ids_tiled = jnp.pad(ids_tiled, (0, n_pad - n))
        ids_2d = ids_tiled.reshape(n_pad, 1)

        vmem_limit = int(min(max(onehot_vmem_needed(T), 8 * 1024 * 1024), usable_vmem))

        def _run(table_spec):
            return pl.pallas_call(
                _embed_onehot_kernel,
                out_shape=jax.ShapeDtypeStruct((n_pad, D), emb_table.dtype),
                grid_spec=pltpu.PrefetchScalarGridSpec(
                    num_scalar_prefetch=0,
                    grid=(n_pad // T,),
                    in_specs=[
                        # Token-id tile for this step.
                        pl.BlockSpec((T, 1), lambda i: (i, 0)),
                        # Full table, same block every step -> resident in VMEM.
                        table_spec,
                    ],
                    out_specs=pl.BlockSpec((T, D), lambda i: (i, 0)),
                ),
                compiler_params=pltpu.CompilerParams(
                    # Disjoint output tiles per step.
                    # TODO(synk): verify 2-TC sharding on v7x (CORE_PARALLEL / core_map).
                    dimension_semantics=("parallel",),
                    vmem_limit_bytes=vmem_limit,
                ),
            )(ids_2d, emb_table)

        try:
            # Single-buffer the resident table (constant index_map => a second
            # pipeline buffer is pure waste).
            out_flat = _run(
                pl.BlockSpec((V, D), lambda i: (0, 0), pipeline_mode=pl.Buffered(1))
            )
        except Exception:
            # Older/stricter Pallas: default double-buffered spec (the VMEM estimate
            # above already budgets for two table buffers).
            out_flat = _run(pl.BlockSpec((V, D), lambda i: (0, 0)))

        if n_pad != n:
            out_flat = out_flat[:n]
        return out_flat.reshape(B, S, D)

    # ----- Path B: large-vocab fallback (per-row DMA gather, no resident table). ----
    # TODO(synk): double-buffered multi-row DMA gather (memory_space=pl.ANY +
    # make_async_copy) to amortize per-row DMA overhead for very large vocabularies.
    vmem_limit = int(min(max(8 * D * itemsize + (2 << 20), 8 * 1024 * 1024), usable_vmem))
    out_rows = pl.pallas_call(
        _embed_row_gather_kernel,
        out_shape=jax.ShapeDtypeStruct((n, 1, D), emb_table.dtype),
        grid_spec=pltpu.PrefetchScalarGridSpec(
            num_scalar_prefetch=1,
            grid=(n,),
            in_specs=[
                # Element index_map: gather table row ids[i] directly.
                pl.BlockSpec((pl.Element(1), D), lambda i, ids: (ids[i], 0)),
            ],
            out_specs=pl.BlockSpec((1, 1, D), lambda i, ids: (i, 0, 0)),
        ),
        compiler_params=pltpu.CompilerParams(
            dimension_semantics=("arbitrary",),
            vmem_limit_bytes=vmem_limit,
        ),
    )(ids_flat, emb_table)
    return out_rows.reshape(B, S, D)


if __name__ == "__main__":
    # Small shapes consistent with the module's forward:
    # Embedder(input_dim=64, d_model=128), x = token ids [batch=2, seq=8].
    vocab_size = 64
    d_model = 128
    batch, seq = 2, 8

    key = jax.random.PRNGKey(0)
    k_ids, k_emb = jax.random.split(key)

    # nn.Embedding default init is N(0, 1); replicate deterministically.
    emb_table = jax.random.normal(k_emb, (vocab_size, d_model), dtype=jnp.float32)
    x = jax.random.randint(k_ids, (batch, seq), 0, vocab_size, dtype=jnp.int32)

    out = embedder_forward(x, emb_table)
    out = jax.block_until_ready(out)

    # Sanity check against the pure-JAX reference (jnp.take == nn.Embedding lookup).
    ref = jnp.take(emb_table, x, axis=0)
    assert out.shape == (batch, seq, d_model), out.shape
    assert jnp.allclose(out, ref), "Pallas embedding lookup mismatch"

    print("KERNEL_OK")
</pallas_src>

<mosaic_0001>
module attributes {stable_mosaic.version = 11 : i64} {
  func.func @_embed_onehot_kernel(%arg0: i32, %arg1: memref<16x1xi32, #tpu.memory_space<vmem>>, %arg2: memref<64x128xf32, #tpu.memory_space<vmem>>, %arg3: memref<16x128xf32, #tpu.memory_space<vmem>>) attributes {dimension_semantics = [#tpu.dimension_semantics<parallel>], iteration_bounds = array<i64: 1>, scalar_prefetch = 0 : i64, scratch_operands = 0 : i64, tpu.core_type = #tpu.core_type<tc>, window_params = [{transform_indices = @transform_0, window_bounds = array<i64: 16, 1>}, {pipeline_mode = #tpu.pipeline_mode<synchronous>, transform_indices = @transform_1, window_bounds = array<i64: 64, 128>}, {transform_indices = @transform_2, window_bounds = array<i64: 16, 128>}]} {
    %c0 = arith.constant 0 : index
    %c0_0 = arith.constant 0 : index
    %0 = vector.load %arg1[%c0, %c0_0] : memref<16x1xi32, #tpu.memory_space<vmem>>, vector<16x1xi32>
    %1 = tpu.iota {dimensions = array<i32: 1>} : vector<16x64xi32>
    %2 = vector.broadcast %0 : vector<16x1xi32> to vector<16x64xi32>
    %3 = arith.cmpi eq, %2, %1 : vector<16x64xi32>
    %4 = arith.extui %3 : vector<16x64xi1> to vector<16x64xi32>
    %5 = arith.sitofp %4 : vector<16x64xi32> to vector<16x64xf32>
    %c0_1 = arith.constant 0 : index
    %c0_2 = arith.constant 0 : index
    %6 = vector.load %arg2[%c0_1, %c0_2] : memref<64x128xf32, #tpu.memory_space<vmem>>, vector<64x128xf32>
    %cst = arith.constant dense<0.000000e+00> : vector<16x128xf32>
    %7 = tpu.matmul %5, %6, %cst {dimension_numbers = #tpu.dot_dimension_numbers<[1], [0], [0], [1], [0, 0, 1, 1], [], []>} : vector<16x64xf32>, vector<64x128xf32>, vector<16x128xf32> -> vector<16x128xf32>
    %c0_3 = arith.constant 0 : index
    %c0_4 = arith.constant 0 : index
    %8 = vector.load %arg3[%c0_3, %c0_4] : memref<16x128xf32, #tpu.memory_space<vmem>>, vector<16x128xf32>
    tpu.vector_store %arg3[%c0_3, %c0_4], %7 {strides = array<i32>} : memref<16x128xf32, #tpu.memory_space<vmem>>, vector<16x128xf32>,
    return
  }
  func.func @transform_0(%arg0: i32) -> (i32, i32) {
    %c0_i32 = arith.constant 0 : i32
    %c0_i32_0 = arith.constant 0 : i32
    return %arg0, %c0_i32 : i32, i32
  }
  func.func @transform_1(%arg0: i32) -> (i32, i32) {
    %c0_i32 = arith.constant 0 : i32
    %c0_i32_0 = arith.constant 0 : i32
    %c0_i32_1 = arith.constant 0 : i32
    return %c0_i32, %c0_i32_0 : i32, i32
  }
  func.func @transform_2(%arg0: i32) -> (i32, i32) {
    %c0_i32 = arith.constant 0 : i32
    %c0_i32_0 = arith.constant 0 : i32
    return %arg0, %c0_i32 : i32, i32
  }
}

module attributes {stable_mosaic.version = 11 : i64} {
  func.func @_embed_onehot_kernel(%arg0: i32, %arg1: memref<16x1xi32, #tpu.memory_space<vmem>>, %arg2: memref<64x128xf32, #tpu.memory_space<vmem>>, %arg3: memref<16x128xf32, #tpu.memory_space<vmem>>) attributes {dimension_semantics = [#tpu.dimension_semantics<parallel>], iteration_bounds = array<i64: 1>, scalar_prefetch = 0 : i64, scratch_operands = 0 : i64, tpu.core_type = #tpu.core_type<tc>, window_params = [{transform_indices = @transform_0, window_bounds = array<i64: 16, 1>}, {pipeline_mode = #tpu.pipeline_mode<synchronous>, transform_indices = @transform_1, window_bounds = array<i64: 64, 128>}, {transform_indices = @transform_2, window_bounds = array<i64: 16, 128>}]} {
    %c0 = arith.constant 0 : index
    %c0_0 = arith.constant 0 : index
    %0 = vector.load %arg1[%c0, %c0_0] : memref<16x1xi32, #tpu.memory_space<vmem>>, vector<16x1xi32>
    %1 = tpu.iota {dimensions = array<i32: 1>} : vector<16x64xi32>
    %2 = vector.broadcast %0 : vector<16x1xi32> to vector<16x64xi32>
    %3 = arith.cmpi eq, %2, %1 : vector<16x64xi32>
    %4 = arith.extui %3 : vector<16x64xi1> to vector<16x64xi32>
    %5 = arith.sitofp %4 : vector<16x64xi32> to vector<16x64xf32>
    %c0_1 = arith.constant 0 : index
    %c0_2 = arith.constant 0 : index
    %6 = vector.load %arg2[%c0_1, %c0_2] : memref<64x128xf32, #tpu.memory_space<vmem>>, vector<64x128xf32>
    %cst = arith.constant dense<0.000000e+00> : vector<16x128xf32>
    %7 = tpu.matmul %5, %6, %cst {dimension_numbers = #tpu.dot_dimension_numbers<[1], [0], [0], [1], [0, 0, 1, 1], [], []>} : vector<16x64xf32>, vector<64x128xf32>, vector<16x128xf32> -> vector<16x128xf32>
    %c0_3 = arith.constant 0 : index
    %c0_4 = arith.constant 0 : index
    %8 = vector.load %arg3[%c0_3, %c0_4] : memref<16x128xf32, #tpu.memory_space<vmem>>, vector<16x128xf32>
    tpu.vector_store %arg3[%c0_3, %c0_4], %7 {strides = array<i32>} : memref<16x128xf32, #tpu.memory_space<vmem>>, vector<16x128xf32>,
    return
  }
  func.func @transform_0(%arg0: i32) -> (i32, i32) {
    %c0_i32 = arith.constant 0 : i32
    %c0_i32_0 = arith.constant 0 : i32
    return %arg0, %c0_i32 : i32, i32
  }
  func.func @transform_1(%arg0: i32) -> (i32, i32) {
    %c0_i32 = arith.constant 0 : i32
    %c0_i32_0 = arith.constant 0 : i32
    %c0_i32_1 = arith.constant 0 : i32
    return %c0_i32, %c0_i32_0 : i32, i32
  }
  func.func @transform_2(%arg0: i32) -> (i32, i32) {
    %c0_i32 = arith.constant 0 : i32
    %c0_i32_0 = arith.constant 0 : i32
    return %arg0, %c0_i32 : i32, i32
  }
}

</mosaic_0001>

<llo_original>
// kernel: tpu_custom_call.1
$region0: #{tpu_custom_call.1}
  #allocation0 [shape = 'u32[]', space=smem, size = 0x4, offset = 0x4, fixed_abs, tag = 'smem constant byte address 0x4 - core index']
  #allocation1 [shape = 'u32[144,128]{1,0:T(1,128)}', space=vmem, size = 0x12000, scoped, tag = 'internal scratch']
  %s0 = inlined_call_operand.vmem [shape: s32[16,1], index: 0, kind: input, shape index: {}]
  %s1 = inlined_call_operand.hbm [shape: f32[64,128], index: 1, kind: input, shape index: {}]
  %s2 = inlined_call_operand.hbm [shape: f32[16,128], index: 2, kind: output, shape index: {}]
  %s3 = sld [smem:[#allocation0]]
  $region22: #{tpu_custom_call.1} parent=0
    _
  %s5 = ssub.s32 1, %s3
  %s6 = scalar_select 0, %s5, %s3
  $region1: #{tpu_custom_call.1} parent=0
    #allocation2 [shape = 'u8[32768]{0}', space=vmem, size = 0x8000, scoped, tag = 'input window, operand 1, single buffered']
    #allocation3 [shape = 's32[1]{0}', space=sflag, size = 0x4, scoped, tag = 'scoped memory for tpu_custom_call.1']
    #allocation4 [shape = 's32[1]{0}', space=sflag, size = 0x4, scoped, tag = 'scoped memory for tpu_custom_call.1']
    #allocation5 [shape = 'u8[8192]{0}', space=vmem, size = 0x2000, scoped, tag = 'output window, operand 0, single buffered']
    %7 = vsyncpa [#allocation3], 0
    %8 = vsyncpa [#allocation4], 0
    // Predicated region
    $region2: #{tpu_custom_call.1} parent=1 // pred_check
      _
    $region3: #{tpu_custom_call.1} parent=1 // pred_check_branch
      %10 = sbr.rel (0) target = $region5
    $region4: #{tpu_custom_call.1} parent=1 // pred_region
      _
    $region5: #{tpu_custom_call.1} parent=1 // pred_fallthru
      _
    // Predicated region
    $region6: #{tpu_custom_call.1} parent=1 // pred_check
      _
    $region7: #{tpu_custom_call.1} parent=1 // pred_check_branch
      %12 = sbr.rel (0) target = $region9
    $region8: #{tpu_custom_call.1} parent=1 // pred_region
      %s14 = ssub.s32 1024, 1024
      %15 = vsyncadd [#allocation3], %s14
      %s16 = sshll.u32 [#allocation2], 4
      %s17 = int_to_ptr.vmem [resolvable:$true] %s16
      %22 = dma.hbm_to_vmem [thread:$0]  %s1, 1024, %s17, [#allocation3], 128, 128, 8
    $region9: #{tpu_custom_call.1} parent=1 // pred_fallthru
      _
    // Predicated region
    $region10: #{tpu_custom_call.1} parent=1 // pred_check
      _
    $region11: #{tpu_custom_call.1} parent=1 // pred_check_branch
      %24 = sbr.rel (0) target = $region13
    $region12: #{tpu_custom_call.1} parent=1 // pred_region
      %25 = dma.done [#allocation3], 1024
    $region13: #{tpu_custom_call.1} parent=1 // pred_fallthru
      _
    %v26 = vld [vmem:[%s0] sm:$0xff]
    %v27 = vld [vmem:[%s0 + $0x8] sm:$0xff]
    %v28 = vlaneseq
    %v29 = vand.u32 %v28, 127
    %30 = vset.pattern.permute.xlu0 0
    %31 = vperm.xlu0 %30, %v26
    %v32 = vpop.permute.xlu0 %31
    %33 = vset.pattern.permute.xlu0 0
    %34 = vperm.xlu0 %33, %v27
    %v35 = vpop.permute.xlu0 %34
    %vm36 = vcmp.eq.s32.totalorder %v32, %v29
    %vm37 = vcmp.eq.s32.totalorder %v35, %v29
    %v38 = vsel %vm36, 1, 0
    %v39 = vsel %vm37, 1, 0
    %v40 = vcvt.s32.f32 %v38
    %v41 = vcvt.s32.f32 %v39
    %v42 = vld [vmem:[#allocation2] sm:$0xff]
    %v43 = vld [vmem:[#allocation2 + $0x8] sm:$0xff]
    %v44 = vld [vmem:[#allocation2 + $0x10] sm:$0xff]
    %v45 = vld [vmem:[#allocation2 + $0x18] sm:$0xff]
    %v46 = vld [vmem:[#allocation2 + $0x20] sm:$0xff]
    %v47 = vld [vmem:[#allocation2 + $0x28] sm:$0xff]
    %v48 = vld [vmem:[#allocation2 + $0x30] sm:$0xff]
    %v49 = vld [vmem:[#allocation2 + $0x38] sm:$0xff]
    %vm50 = vcmask 523264
    %v52 = vsel %vm50, %v40, 0
    %v55 = vsel %vm50, %v41, 0
    %57 = vmatprep.subr.mxu0 0.0
    %58 = vmatpush1.msra.mxu0 %v42
    %59 = vmatprep.subr.mxu0 0.0
    %60 = vmatpush1.msra.mxu0 %v43
    %61 = vmatprep.subr.mxu0 0.0
    %62 = vmatpush1.msra.mxu0 %v44
    %63 = vmatprep.subr.mxu0 0.0
    %64 = vmatpush1.msra.mxu0 %v45
    %65 = vmatprep.subr.mxu0 0.0
    %66 = vmatpush1.msra.mxu0 %v46
    %67 = vmatprep.subr.mxu0 0.0
    %68 = vmatpush1.msra.mxu0 %v47
    %69 = vmatprep.subr.mxu0 0.0
    %70 = vmatpush1.msra.mxu0 %v48
    %71 = vmatprep.subr.mxu0 0.0
    %72 = vmatpush1.msra.mxu0 %v49
    %73 = vmatprep.subr.mxu0 0.0
    %74 = vmatpush1.msra.mxu0 0.0
    %75 = vmatprep.subr.mxu0 0.0
    %76 = vmatpush1.msra.mxu0 0.0
    %77 = vmatprep.subr.mxu0 0.0
    %78 = vmatpush1.msra.mxu0 0.0
    %79 = vmatprep.subr.mxu0 0.0
    %80 = vmatpush1.msra.mxu0 0.0
    %81 = vmatprep.subr.mxu0 0.0
    %82 = vmatpush1.msra.mxu0 0.0
    %83 = vmatprep.subr.mxu0 0.0
    %84 = vmatpush1.msra.mxu0 0.0
    %85 = vmatprep.subr.mxu0 0.0
    %86 = vmatpush1.msra.mxu0 0.0
    %87 = vmatprep.subr.mxu0 0.0
    %88 = vmatpush1.msra.mxu0 0.0
    %89 = vmatprep.subr.mxu0 0.0
    %90 = vmatpush1.msra.mxu0 0.0
    %91 = vmatprep.subr.mxu0 0.0
    %92 = vmatpush1.msra.mxu0 0.0
    %93 = vmatprep.subr.mxu0 0.0
    %94 = vmatpush1.msra.mxu0 0.0
    %95 = vmatprep.subr.mxu0 0.0
    %96 = vmatpush1.msra.mxu0 0.0
    %97 = vmatprep.subr.mxu0 0.0
    %98 = vmatpush1.msra.mxu0 0.0
    %99 = vmatprep.subr.mxu0 0.0
    %100 = vmatpush1.msra.mxu0 0.0
    %101 = vmatprep.subr.mxu0 0.0
    %102 = vmatpush1.msra.mxu0 0.0
    %103 = vmatprep.subr.mxu0 0.0
    %104 = vmatpush1.msra.mxu0 0.0
    %105 = vmatprep.subr.mxu0 0.0
    %106 = vmatpush1.msra.mxu0 0.0
    %107 = vmatprep.subr.mxu0 0.0
    %108 = vmatpush1.msra.mxu0 0.0
    %109 = vmatprep.subr.mxu0 0.0
    %110 = vmatpush1.msra.mxu0 0.0
    %111 = vmatprep.subr.mxu0 0.0
    %112 = vmatpush1.msra.mxu0 0.0
    %113 = vmatprep.subr.mxu0 0.0
    %114 = vmatpush1.msra.mxu0 0.0
    %115 = vmatprep.subr.mxu0 0.0
    %116 = vmatpush1.msra.mxu0 0.0
    %117 = vmatprep.subr.mxu0 0.0
    %118 = vmatpush1.msra.mxu0 0.0
    %119 = vmatprep.subr.mxu0 0.0
    %120 = vmatpush1.msra.mxu0 0.0
    %121 = vmatprep.mubr.f32.mxu0 0.0
    %122 = vmatmul.mubr.f32.gmra.mrb[0].mxu0 %v52
    %v123 = vpop.f32.mrb[0].mxu0
    %v124 = vadd.f32 0.0, %v123
    %v125 = vpop.f32.mrb[0].mxu0
    %126 = vmatprep.mubr.f32.mxu0 0.0
    %127 = vmatmul.mubr.f32.gmra.mrb[0].mxu0 %v55
    %v128 = vpop.f32.mrb[0].mxu0
    %v129 = vadd.f32 0.0, %v128
    %v130 = vpop.f32.mrb[0].mxu0
    %131 = vdwg.mxu0
    %132 = vst [vmem:[#allocation5] sm:$0xff] %v124
    %133 = vst [vmem:[#allocation5 + $0x8] sm:$0xff] %v129
    // Predicated region
    $region14: #{tpu_custom_call.1} parent=1 // pred_check
      _
    $region15: #{tpu_custom_call.1} parent=1 // pred_check_branch
      %135 = sbr.rel (0) target = $region17
    $region16: #{tpu_custom_call.1} parent=1 // pred_region
      %s137 = ssub.s32 256, 256
      %138 = vsyncadd [#allocation4], %s137
      %s139 = sshll.u32 [#allocation5], 4
      %s140 = int_to_ptr.vmem [resolvable:$true] %s139
      %145 = dma.vmem_to_hbm [thread:$0]  %s140, 256, %s2, [#allocation4], 128, 128, 8
    $region17: #{tpu_custom_call.1} parent=1 // pred_fallthru
      _
    // Predicated region
    $region18: #{tpu_custom_call.1} parent=1 // pred_check
      _
    $region19: #{tpu_custom_call.1} parent=1 // pred_check_branch
      %147 = sbr.rel (0) target = $region21
    $region20: #{tpu_custom_call.1} parent=1 // pred_region
      %148 = dma.done [#allocation4], 256
    $region21: #{tpu_custom_call.1} parent=1 // pred_fallthru
      _
    %149 = vsyncpa [#allocation3], 1
    %150 = vsyncpa [#allocation4], 1

// kernel: tpu_custom_call.1
$region0: #{tpu_custom_call.1}
  #allocation0 [shape = 'u32[]', space=smem, size = 0x4, offset = 0x4, fixed_abs, tag = 'smem constant byte address 0x4 - core index']
  #allocation1 [shape = 'u32[144,128]{1,0:T(1,128)}', space=vmem, size = 0x12000, scoped, tag = 'internal scratch']
  %s0 = inlined_call_operand.vmem [shape: s32[16,1], index: 0, kind: input, shape index: {}]
  %s1 = inlined_call_operand.hbm [shape: f32[64,128], index: 1, kind: input, shape index: {}]
  %s2 = inlined_call_operand.hbm [shape: f32[16,128], index: 2, kind: output, shape index: {}]
  %s3 = sld [smem:[#allocation0]]
  $region22: #{tpu_custom_call.1} parent=0
    _
  %s5 = ssub.s32 1, %s3
  %s6 = scalar_select 0, %s5, %s3
  $region1: #{tpu_custom_call.1} parent=0
    #allocation2 [shape = 'u8[32768]{0}', space=vmem, size = 0x8000, scoped, tag = 'input window, operand 1, single buffered']
    #allocation3 [shape = 's32[1]{0}', space=sflag, size = 0x4, scoped, tag = 'scoped memory for tpu_custom_call.1']
    #allocation4 [shape = 's32[1]{0}', space=sflag, size = 0x4, scoped, tag = 'scoped memory for tpu_custom_call.1']
    #allocation5 [shape = 'u8[8192]{0}', space=vmem, size = 0x2000, scoped, tag = 'output window, operand 0, single buffered']
    %7 = vsyncpa [#allocation3], 0
    %8 = vsyncpa [#allocation4], 0
    // Predicated region
    $region2: #{tpu_custom_call.1} parent=1 // pred_check
      _
    $region3: #{tpu_custom_call.1} parent=1 // pred_check_branch
      %10 = sbr.rel (0) target = $region5
    $region4: #{tpu_custom_call.1} parent=1 // pred_region
      _
    $region5: #{tpu_custom_call.1} parent=1 // pred_fallthru
      _
    // Predicated region
    $region6: #{tpu_custom_call.1} parent=1 // pred_check
      _
    $region7: #{tpu_custom_call.1} parent=1 // pred_check_branch
      %12 = sbr.rel (0) target = $region9
    $region8: #{tpu_custom_call.1} parent=1 // pred_region
      %s14 = ssub.s32 1024, 1024
      %15 = vsyncadd [#allocation3], %s14
      %s16 = sshll.u32 [#allocation2], 4
      %s17 = int_to_ptr.vmem [resolvable:$true] %s16
      %22 = dma.hbm_to_vmem [thread:$0]  %s1, 1024, %s17, [#allocation3], 128, 128, 8
    $region9: #{tpu_custom_call.1} parent=1 // pred_fallthru
      _
    // Predicated region
    $region10: #{tpu_custom_call.1} parent=1 // pred_check
      _
    $region11: #{tpu_custom_call.1} parent=1 // pred_check_branch
      %24 = sbr.rel (0) target = $region13
    $region12: #{tpu_custom_call.1} parent=1 // pred_region
      %25 = dma.done [#allocation3], 1024
    $region13: #{tpu_custom_call.1} parent=1 // pred_fallthru
      _
    %v26 = vld [vmem:[%s0] sm:$0xff]
    %v27 = vld [vmem:[%s0 + $0x8] sm:$0xff]
    %v28 = vlaneseq
    %v29 = vand.u32 %v28, 127
    %30 = vset.pattern.permute.xlu0 0
    %31 = vperm.xlu0 %30, %v26
    %v32 = vpop.permute.xlu0 %31
    %33 = vset.pattern.permute.xlu0 0
    %34 = vperm.xlu0 %33, %v27
    %v35 = vpop.permute.xlu0 %34
    %vm36 = vcmp.eq.s32.totalorder %v32, %v29
    %vm37 = vcmp.eq.s32.totalorder %v35, %v29
    %v38 = vsel %vm36, 1, 0
    %v39 = vsel %vm37, 1, 0
    %v40 = vcvt.s32.f32 %v38
    %v41 = vcvt.s32.f32 %v39
    %v42 = vld [vmem:[#allocation2] sm:$0xff]
    %v43 = vld [vmem:[#allocation2 + $0x8] sm:$0xff]
    %v44 = vld [vmem:[#allocation2 + $0x10] sm:$0xff]
    %v45 = vld [vmem:[#allocation2 + $0x18] sm:$0xff]
    %v46 = vld [vmem:[#allocation2 + $0x20] sm:$0xff]
    %v47 = vld [vmem:[#allocation2 + $0x28] sm:$0xff]
    %v48 = vld [vmem:[#allocation2 + $0x30] sm:$0xff]
    %v49 = vld [vmem:[#allocation2 + $0x38] sm:$0xff]
    %vm50 = vcmask 523264
    %v52 = vsel %vm50, %v40, 0
    %v55 = vsel %vm50, %v41, 0
    %57 = vmatprep.subr.mxu0 0.0
    %58 = vmatpush1.msra.mxu0 %v42
    %59 = vmatprep.subr.mxu0 0.0
    %60 = vmatpush1.msra.mxu0 %v43
    %61 = vmatprep.subr.mxu0 0.0
    %62 = vmatpush1.msra.mxu0 %v44
    %63 = vmatprep.subr.mxu0 0.0
    %64 = vmatpush1.msra.mxu0 %v45
    %65 = vmatprep.subr.mxu0 0.0
    %66 = vmatpush1.msra.mxu0 %v46
    %67 = vmatprep.subr.mxu0 0.0
    %68 = vmatpush1.msra.mxu0 %v47
    %69 = vmatprep.subr.mxu0 0.0
    %70 = vmatpush1.msra.mxu0 %v48
    %71 = vmatprep.subr.mxu0 0.0
    %72 = vmatpush1.msra.mxu0 %v49
    %73 = vmatprep.subr.mxu0 0.0
    %74 = vmatpush1.msra.mxu0 0.0
    %75 = vmatprep.subr.mxu0 0.0
    %76 = vmatpush1.msra.mxu0 0.0
    %77 = vmatprep.subr.mxu0 0.0
    %78 = vmatpush1.msra.mxu0 0.0
    %79 = vmatprep.subr.mxu0 0.0
    %80 = vmatpush1.msra.mxu0 0.0
    %81 = vmatprep.subr.mxu0 0.0
    %82 = vmatpush1.msra.mxu0 0.0
    %83 = vmatprep.subr.mxu0 0.0
    %84 = vmatpush1.msra.mxu0 0.0
    %85 = vmatprep.subr.mxu0 0.0
    %86 = vmatpush1.msra.mxu0 0.0
    %87 = vmatprep.subr.mxu0 0.0
    %88 = vmatpush1.msra.mxu0 0.0
    %89 = vmatprep.subr.mxu0 0.0
    %90 = vmatpush1.msra.mxu0 0.0
    %91 = vmatprep.subr.mxu0 0.0
    %92 = vmatpush1.msra.mxu0 0.0
    %93 = vmatprep.subr.mxu0 0.0
    %94 = vmatpush1.msra.mxu0 0.0
    %95 = vmatprep.subr.mxu0 0.0
    %96 = vmatpush1.msra.mxu0 0.0
    %97 = vmatprep.subr.mxu0 0.0
    %98 = vmatpush1.msra.mxu0 0.0
    %99 = vmatprep.subr.mxu0 0.0
    %100 = vmatpush1.msra.mxu0 0.0
    %101 = vmatprep.subr.mxu0 0.0
    %102 = vmatpush1.msra.mxu0 0.0
    %103 = vmatprep.subr.mxu0 0.0
    %104 = vmatpush1.msra.mxu0 0.0
    %105 = vmatprep.subr.mxu0 0.0
    %106 = vmatpush1.msra.mxu0 0.0
    %107 = vmatprep.subr.mxu0 0.0
    %108 = vmatpush1.msra.mxu0 0.0
    %109 = vmatprep.subr.mxu0 0.0
    %110 = vmatpush1.msra.mxu0 0.0
    %111 = vmatprep.subr.mxu0 0.0
    %112 = vmatpush1.msra.mxu0 0.0
    %113 = vmatprep.subr.mxu0 0.0
    %114 = vmatpush1.msra.mxu0 0.0
    %115 = vmatprep.subr.mxu0 0.0
    %116 = vmatpush1.msra.mxu0 0.0
    %117 = vmatprep.subr.mxu0 0.0
    %118 = vmatpush1.msra.mxu0 0.0
    %119 = vmatprep.subr.mxu0 0.0
    %120 = vmatpush1.msra.mxu0 0.0
    %121 = vmatprep.mubr.f32.mxu0 0.0
    %122 = vmatmul.mubr.f32.gmra.mrb[0].mxu0 %v52
    %v123 = vpop.f32.mrb[0].mxu0
    %v124 = vadd.f32 0.0, %v123
    %v125 = vpop.f32.mrb[0].mxu0
    %126 = vmatprep.mubr.f32.mxu0 0.0
    %127 = vmatmul.mubr.f32.gmra.mrb[0].mxu0 %v55
    %v128 = vpop.f32.mrb[0].mxu0
    %v129 = vadd.f32 0.0, %v128
    %v130 = vpop.f32.mrb[0].mxu0
    %131 = vdwg.mxu0
    %132 = vst [vmem:[#allocation5] sm:$0xff] %v124
    %133 = vst [vmem:[#allocation5 + $0x8] sm:$0xff] %v129
    // Predicated region
    $region14: #{tpu_custom_call.1} parent=1 // pred_check
      _
    $region15: #{tpu_custom_call.1} parent=1 // pred_check_branch
      %135 = sbr.rel (0) target = $region17
    $region16: #{tpu_custom_call.1} parent=1 // pred_region
      %s137 = ssub.s32 256, 256
      %138 = vsyncadd [#allocation4], %s137
      %s139 = sshll.u32 [#allocation5], 4
      %s140 = int_to_ptr.vmem [resolvable:$true] %s139
      %145 = dma.vmem_to_hbm [thread:$0]  %s140, 256, %s2, [#allocation4], 128, 128, 8
    $region17: #{tpu_custom_call.1} parent=1 // pred_fallthru
      _
    // Predicated region
    $region18: #{tpu_custom_call.1} parent=1 // pred_check
      _
    $region19: #{tpu_custom_call.1} parent=1 // pred_check_branch
      %147 = sbr.rel (0) target = $region21
    $region20: #{tpu_custom_call.1} parent=1 // pred_region
      %148 = dma.done [#allocation4], 256
    $region21: #{tpu_custom_call.1} parent=1 // pred_fallthru
      _
    %149 = vsyncpa [#allocation3], 1
    %150 = vsyncpa [#allocation4], 1

</llo_original>
